<compile_context>
chip_gen: v6e
topology: v6e:2x2x1
jax: 0.10.0
libtpu: 0.0.40
codegen_flags: <defaults>
</compile_context>

<pallas_src>
import functools

import jax
import jax.numpy as jnp
from jax import lax
from jax.experimental import pallas as pl
from jax.experimental.pallas import tpu as pltpu


# ---------------- config (small, consistent with the module) ----------------
VOCAB_SIZE = 32
HIDDEN_SIZE = 32
MAX_POSITION_EMBEDDINGS = 16
TYPE_VOCAB_SIZE = 2
LAYER_NORM_EPS = 1e-12

BATCH = 2
SEQ = 8

_MAX_ROW_TILE = 1024   # rows (tokens) per grid step; 1024x32 f32 out block = 128 KiB
_MIN_GRID_STEPS = 2    # give both v7x TensorCores work when N is non-trivial


# ------------------------------- kernel -------------------------------------
def _emb_ln_kernel(idx_ref, tab_ref, gamma_ref, beta_ref, o_ref, *, eps):
    # idx_ref: (3, TM, 1) int32, already offset into the fused table:
    #   plane 0 = input_ids            (in [0, V))
    #   plane 1 = V + position_ids     (in [V, V+P))
    #   plane 2 = V + P + token_types  (in [V+P, V+P+T)), or == Vtot_pad
    #             (out of range -> contributes exactly zero, matching the
    #             module's token_type_ids=None branch).
    ids = idx_ref[0]   # (TM, 1)
    pos = idx_ref[1]   # (TM, 1)
    tts = idx_ref[2]   # (TM, 1)

    vtot = tab_ref.shape[0]

    # One (1, Vtot) iota row broadcast against the (TM, 1) index columns ->
    # a (TM, Vtot) one-hot with (up to) three disjoint hits per row; no
    # (TM, Vtot) iota is materialized (vreg-pressure fix from review).
    iota = lax.broadcasted_iota(jnp.int32, (1, vtot), 1)
    onehot = ((iota == ids) | (iota == pos) | (iota == tts)).astype(jnp.float32)

    # Single fused gather+add on the MXU: onehot @ [word; pos; type] yields
    # word_emb + pos_emb + type_emb directly.  precision=HIGHEST pins the f32
    # decomposition so table values are not truncated to bf16 by the default
    # matmul precision (review correctness concern).
    x = jnp.dot(onehot, tab_ref[...],
                preferred_element_type=jnp.float32,
                precision=lax.Precision.HIGHEST)          # (TM, H)

    # BertLayerNorm.  sum(x) and sum(x*x) have no data dependence on each
    # other (both cross-lane reductions can issue concurrently on the XLU);
    # var = E[x^2] - E[x]^2, clamped at 0 against cancellation (exact two-pass
    # equivalent to ~1e-7 rel for these magnitudes, well inside 1e-5).
    h = x.shape[-1]
    inv_h = 1.0 / h
    s_sum = jnp.sum(x, axis=-1, keepdims=True)
    q_sum = jnp.sum(x * x, axis=-1, keepdims=True)
    u = s_sum * inv_h
    var = jnp.maximum(q_sum * inv_h - u * u, 0.0)
    y = (x - u) * lax.rsqrt(var + eps)

    # TODO(synk): nn.Dropout is identity in eval mode; not applied here.
    o_ref[...] = (y * gamma_ref[...] + beta_ref[...]).astype(o_ref.dtype)


# --------------------------- parameter fusion --------------------------------
def build_fused_params(word_table, pos_table, type_table, gamma, beta):
    """Build the fused [word; pos; type] table (rows padded to a multiple of
    128 for MXU contraction-dim occupancy) and 2-D gamma/beta.

    Hoisted out of the per-call wrapper (perf review): at realistic vocab this
    is a ~100 MB HBM copy and must run once at parameter-load time, not per
    forward call.  Keep K padding at 128 (not 256) -- the live contraction is
    only V+P+T rows; zero-padding K further is pure waste.
    """
    v, h = word_table.shape
    p = pos_table.shape[0]
    t = type_table.shape[0]
    vtot = v + p + t
    vtot_pad = pl.cdiv(vtot, 128) * 128
    fused = jnp.concatenate([word_table, pos_table, type_table],
                            axis=0).astype(jnp.float32)
    fused = jnp.pad(fused, ((0, vtot_pad - vtot), (0, 0)))
    gamma2d = gamma.reshape(1, h).astype(jnp.float32)
    beta2d = beta.reshape(1, h).astype(jnp.float32)
    return fused, gamma2d, beta2d, (v, p, t)


# ------------------------------- wrapper --------------------------------------
def variable_norm_embeddings(input_ids, token_type_ids, position_ids,
                             fused_table, gamma2d, beta2d, table_sizes,
                             *, eps=LAYER_NORM_EPS):
    v, p, t = table_sizes
    b, s = input_ids.shape
    vtot_pad, h = fused_table.shape
    n = b * s

    if position_ids is None:
        position_ids = jnp.broadcast_to(
            jnp.arange(s, dtype=jnp.int32)[None, :], (b, s))

    if token_type_ids is None:
        # Module adds exactly zeros in this branch: point the type plane at an
        # out-of-range column (>= Vtot_pad) so the one-hot has no hit there.
        tt_off = jnp.full((n,), vtot_pad, dtype=jnp.int32)
    else:
        tt_off = token_type_ids.reshape(n).astype(jnp.int32) + (v + p)

    # Fused, pre-offset index array: (3, N, 1) int32 (one input DMA stream).
    idx = jnp.stack(
        [input_ids.reshape(n).astype(jnp.int32),
         position_ids.reshape(n).astype(jnp.int32) + v,
         tt_off],
        axis=0).reshape(3, n, 1)

    # Row-tile selection: at least _MIN_GRID_STEPS grid steps when there is
    # more than one sublane tile of rows ("parallel" only shards across v7x's
    # two TensorCores if the grid has >= 2 steps; extra cost on 1-TC chips is
    # one ~0.35us step), capped at _MAX_ROW_TILE to amortize per-step overhead
    # at large B*S.
    n8 = pl.cdiv(n, 8) * 8
    if n8 <= 8:
        row_tile = 8
    else:
        row_tile = min(_MAX_ROW_TILE, pl.cdiv(n8, _MIN_GRID_STEPS * 8) * 8)
    n_pad = pl.cdiv(n, row_tile) * row_tile

    if n_pad != n:
        # Pad rows as real (id=0, pos=0, type=0) tokens so every padded
        # one-hot row keeps the disjoint-hit structure regardless of whether
        # table row 0 is zero; padded rows are sliced off below.
        pad = jnp.broadcast_to(
            jnp.array([0, v, v + p], dtype=jnp.int32).reshape(3, 1, 1),
            (3, n_pad - n, 1))
        idx = jnp.concatenate([idx, pad], axis=1)

    grid = (n_pad // row_tile,)

    out_flat = pl.pallas_call(
        functools.partial(_emb_ln_kernel, eps=eps),
        out_shape=jax.ShapeDtypeStruct((n_pad, h), jnp.float32),
        grid_spec=pltpu.PrefetchScalarGridSpec(
            num_scalar_prefetch=0,
            grid=grid,
            in_specs=[
                pl.BlockSpec((3, row_tile, 1), lambda i: (0, i, 0)),   # fused ids
                # Resident operands (constant index_map -> DMA'd once).
                # TODO(synk): at realistic table sizes single-buffer these
                # (pipeline_mode=pl.Buffered(1)) so the resident table is not
                # double-buffered against v7x's 64 MiB-per-TC VMEM.
                pl.BlockSpec((vtot_pad, h), lambda i: (0, 0)),         # fused table
                pl.BlockSpec((1, h), lambda i: (0, 0)),                # gamma
                pl.BlockSpec((1, h), lambda i: (0, 0)),                # beta
            ],
            out_specs=pl.BlockSpec((row_tile, h), lambda i: (i, 0)),
        ),
        compiler_params=pltpu.CompilerParams(
            dimension_semantics=("parallel",),
            vmem_limit_bytes=32 * 1024 * 1024),
    )(idx, fused_table, gamma2d, beta2d)

    return out_flat[:n].reshape(b, s, h)


# ------------------------------- reference -----------------------------------
def _reference(input_ids, token_type_ids, position_ids,
               word_table, pos_table, type_table, gamma, beta, eps):
    we = word_table[input_ids]
    pe = pos_table[position_ids]
    te = type_table[token_type_ids]
    x = we + pe + te
    u = jnp.mean(x, axis=-1, keepdims=True)
    s = jnp.mean((x - u) ** 2, axis=-1, keepdims=True)
    return (x - u) / jnp.sqrt(s + eps) * gamma + beta


# --------------------------------- main --------------------------------------
if __name__ == "__main__":
    key = jax.random.PRNGKey(0)
    k_w, k_p, k_t, k_ids, k_tt = jax.random.split(key, 5)

    # Deterministic parameter init (BERT-style: normal * 0.02, padding_idx=0 row zeroed).
    word_table = jax.random.normal(k_w, (VOCAB_SIZE, HIDDEN_SIZE), jnp.float32) * 0.02
    word_table = word_table.at[0].set(0.0)
    pos_table = jax.random.normal(k_p, (MAX_POSITION_EMBEDDINGS, HIDDEN_SIZE), jnp.float32) * 0.02
    pos_table = pos_table.at[0].set(0.0)
    type_table = jax.random.normal(k_t, (TYPE_VOCAB_SIZE, HIDDEN_SIZE), jnp.float32) * 0.02
    type_table = type_table.at[0].set(0.0)
    gamma = jnp.ones((HIDDEN_SIZE,), jnp.float32)
    beta = jnp.zeros((HIDDEN_SIZE,), jnp.float32)

    # Built once at parameter-load time (hoisted out of the forward call).
    fused_table, gamma2d, beta2d, table_sizes = build_fused_params(
        word_table, pos_table, type_table, gamma, beta)

    # Example inputs.
    input_ids = jax.random.randint(k_ids, (BATCH, SEQ), 0, VOCAB_SIZE, jnp.int32)
    token_type_ids = jax.random.randint(k_tt, (BATCH, SEQ), 0, TYPE_VOCAB_SIZE, jnp.int32)
    # position_ids default: arange(seq) broadcast over batch (as in the module)
    position_ids = jnp.broadcast_to(jnp.arange(SEQ, dtype=jnp.int32)[None, :],
                                    (BATCH, SEQ))

    out = variable_norm_embeddings(input_ids, token_type_ids, position_ids,
                                   fused_table, gamma2d, beta2d, table_sizes)
    out = jax.block_until_ready(out)

    ref = _reference(input_ids, token_type_ids, position_ids,
                     word_table, pos_table, type_table, gamma, beta,
                     LAYER_NORM_EPS)

    assert out.shape == (BATCH, SEQ, HIDDEN_SIZE)
    assert jnp.allclose(out, ref, atol=1e-5, rtol=1e-5), "mismatch vs JAX reference"
    print("KERNEL_OK")
</pallas_src>

<mosaic_0001>
module attributes {stable_mosaic.version = 11 : i64} {
  func.func @_emb_ln_kernel(%arg0: i32, %arg1: memref<3x8x1xi32, #tpu.memory_space<vmem>>, %arg2: memref<128x32xf32, #tpu.memory_space<vmem>>, %arg3: memref<1x32xf32, #tpu.memory_space<vmem>>, %arg4: memref<1x32xf32, #tpu.memory_space<vmem>>, %arg5: memref<8x32xf32, #tpu.memory_space<vmem>>) attributes {dimension_semantics = [#tpu.dimension_semantics<parallel>], iteration_bounds = array<i64: 2>, scalar_prefetch = 0 : i64, scratch_operands = 0 : i64, tpu.core_type = #tpu.core_type<tc>, window_params = [{transform_indices = @transform_0, window_bounds = array<i64: 3, 8, 1>}, {pipeline_mode = #tpu.pipeline_mode<synchronous>, transform_indices = @transform_1, window_bounds = array<i64: 128, 32>}, {pipeline_mode = #tpu.pipeline_mode<synchronous>, transform_indices = @transform_2, window_bounds = array<i64: 1, 32>}, {pipeline_mode = #tpu.pipeline_mode<synchronous>, transform_indices = @transform_3, window_bounds = array<i64: 1, 32>}, {transform_indices = @transform_4, window_bounds = array<i64: 8, 32>}]} {
    %c0 = arith.constant 0 : index
    %c0_0 = arith.constant 0 : index
    %c0_1 = arith.constant 0 : index
    %0 = vector.load %arg1[%c0, %c0_0, %c0_1] : memref<3x8x1xi32, #tpu.memory_space<vmem>>, vector<1x8x1xi32>
    %1 = vector.shape_cast %0 : vector<1x8x1xi32> to vector<8x1xi32>
    %c1 = arith.constant 1 : index
    %c0_2 = arith.constant 0 : index
    %c0_3 = arith.constant 0 : index
    %2 = vector.load %arg1[%c1, %c0_2, %c0_3] : memref<3x8x1xi32, #tpu.memory_space<vmem>>, vector<1x8x1xi32>
    %3 = vector.shape_cast %2 : vector<1x8x1xi32> to vector<8x1xi32>
    %c2 = arith.constant 2 : index
    %c0_4 = arith.constant 0 : index
    %c0_5 = arith.constant 0 : index
    %4 = vector.load %arg1[%c2, %c0_4, %c0_5] : memref<3x8x1xi32, #tpu.memory_space<vmem>>, vector<1x8x1xi32>
    %5 = vector.shape_cast %4 : vector<1x8x1xi32> to vector<8x1xi32>
    %6 = tpu.iota {dimensions = array<i32: 1>} : vector<1x128xi32>
    %7 = vector.broadcast %6 : vector<1x128xi32> to vector<8x128xi32>
    %8 = vector.broadcast %1 : vector<8x1xi32> to vector<8x128xi32>
    %9 = arith.cmpi eq, %7, %8 : vector<8x128xi32>
    %10 = vector.broadcast %6 : vector<1x128xi32> to vector<8x128xi32>
    %11 = vector.broadcast %3 : vector<8x1xi32> to vector<8x128xi32>
    %12 = arith.cmpi eq, %10, %11 : vector<8x128xi32>
    %13 = arith.ori %9, %12 : vector<8x128xi1>
    %14 = vector.broadcast %6 : vector<1x128xi32> to vector<8x128xi32>
    %15 = vector.broadcast %5 : vector<8x1xi32> to vector<8x128xi32>
    %16 = arith.cmpi eq, %14, %15 : vector<8x128xi32>
    %17 = arith.ori %13, %16 : vector<8x128xi1>
    %18 = arith.extui %17 : vector<8x128xi1> to vector<8x128xi32>
    %19 = arith.sitofp %18 : vector<8x128xi32> to vector<8x128xf32>
    %c0_6 = arith.constant 0 : index
    %c0_7 = arith.constant 0 : index
    %20 = vector.load %arg2[%c0_6, %c0_7] : memref<128x32xf32, #tpu.memory_space<vmem>>, vector<128x32xf32>
    %cst = arith.constant dense<0.000000e+00> : vector<8x32xf32>
    %21 = tpu.matmul %19, %20, %cst {dimension_numbers = #tpu.dot_dimension_numbers<[1], [0], [0], [1], [0, 0, 1, 1], [], []>, precision = #tpu.contract_precision<fp32>} : vector<8x128xf32>, vector<128x32xf32>, vector<8x32xf32> -> vector<8x32xf32>
    %cst_8 = arith.constant dense<0.000000e+00> : vector<8xf32>
    %22 = vector.multi_reduction <add>, %21, %cst_8 [1] : vector<8x32xf32> to vector<8xf32>
    %23 = vector.shape_cast %22 : vector<8xf32> to vector<8x1xf32>
    %24 = arith.mulf %21, %21 : vector<8x32xf32>
    %cst_9 = arith.constant dense<0.000000e+00> : vector<8xf32>
    %25 = vector.multi_reduction <add>, %24, %cst_9 [1] : vector<8x32xf32> to vector<8xf32>
    %26 = vector.shape_cast %25 : vector<8xf32> to vector<8x1xf32>
    %cst_10 = arith.constant 3.125000e-02 : f32
    %27 = vector.broadcast %cst_10 : f32 to vector<8x1xf32>
    %28 = arith.mulf %23, %27 : vector<8x1xf32>
    %cst_11 = arith.constant 3.125000e-02 : f32
    %29 = vector.broadcast %cst_11 : f32 to vector<8x1xf32>
    %30 = arith.mulf %26, %29 : vector<8x1xf32>
    %31 = arith.mulf %28, %28 : vector<8x1xf32>
    %32 = arith.subf %30, %31 : vector<8x1xf32>
    %cst_12 = arith.constant 0.000000e+00 : f32
    %33 = vector.broadcast %cst_12 : f32 to vector<8x1xf32>
    %34 = arith.maximumf %32, %33 : vector<8x1xf32>
    %35 = vector.broadcast %28 : vector<8x1xf32> to vector<8x32xf32>
    %36 = arith.subf %21, %35 : vector<8x32xf32>
    %cst_13 = arith.constant 9.99999996E-13 : f32
    %37 = vector.broadcast %cst_13 : f32 to vector<8x1xf32>
    %38 = arith.addf %34, %37 : vector<8x1xf32>
    %39 = math.rsqrt %38 : vector<8x1xf32>
    %40 = vector.broadcast %39 : vector<8x1xf32> to vector<8x32xf32>
    %41 = arith.mulf %36, %40 : vector<8x32xf32>
    %c0_14 = arith.constant 0 : index
    %c0_15 = arith.constant 0 : index
    %42 = vector.load %arg3[%c0_14, %c0_15] : memref<1x32xf32, #tpu.memory_space<vmem>>, vector<1x32xf32>
    %43 = vector.broadcast %42 : vector<1x32xf32> to vector<8x32xf32>
    %44 = arith.mulf %41, %43 : vector<8x32xf32>
    %c0_16 = arith.constant 0 : index
    %c0_17 = arith.constant 0 : index
    %45 = vector.load %arg4[%c0_16, %c0_17] : memref<1x32xf32, #tpu.memory_space<vmem>>, vector<1x32xf32>
    %46 = vector.broadcast %45 : vector<1x32xf32> to vector<8x32xf32>
    %47 = arith.addf %44, %46 : vector<8x32xf32>
    %c0_18 = arith.constant 0 : index
    %c0_19 = arith.constant 0 : index
    %48 = vector.load %arg5[%c0_18, %c0_19] : memref<8x32xf32, #tpu.memory_space<vmem>>, vector<8x32xf32>
    tpu.vector_store %arg5[%c0_18, %c0_19], %47 {strides = array<i32>} : memref<8x32xf32, #tpu.memory_space<vmem>>, vector<8x32xf32>,
    return
  }
  func.func @transform_0(%arg0: i32) -> (i32, i32, i32) {
    %c0_i32 = arith.constant 0 : i32
    %c0_i32_0 = arith.constant 0 : i32
    %c0_i32_1 = arith.constant 0 : i32
    return %c0_i32, %arg0, %c0_i32_0 : i32, i32, i32
  }
  func.func @transform_1(%arg0: i32) -> (i32, i32) {
    %c0_i32 = arith.constant 0 : i32
    %c0_i32_0 = arith.constant 0 : i32
    %c0_i32_1 = arith.constant 0 : i32
    return %c0_i32, %c0_i32_0 : i32, i32
  }
  func.func @transform_2(%arg0: i32) -> (i32, i32) {
    %c0_i32 = arith.constant 0 : i32
    %c0_i32_0 = arith.constant 0 : i32
    %c0_i32_1 = arith.constant 0 : i32
    return %c0_i32, %c0_i32_0 : i32, i32
  }
  func.func @transform_3(%arg0: i32) -> (i32, i32) {
    %c0_i32 = arith.constant 0 : i32
    %c0_i32_0 = arith.constant 0 : i32
    %c0_i32_1 = arith.constant 0 : i32
    return %c0_i32, %c0_i32_0 : i32, i32
  }
  func.func @transform_4(%arg0: i32) -> (i32, i32) {
    %c0_i32 = arith.constant 0 : i32
    %c0_i32_0 = arith.constant 0 : i32
    return %arg0, %c0_i32 : i32, i32
  }
}

</mosaic_0001>

<llo_original>
// kernel: tpu_custom_call.1
$region0: #{tpu_custom_call.1}
  #allocation0 [shape = 'u32[]', space=smem, size = 0x4, offset = 0x4, fixed_abs, tag = 'smem constant byte address 0x4 - core index']
  #allocation1 [shape = 'u32[144,128]{1,0:T(1,128)}', space=vmem, size = 0x12000, scoped, tag = 'internal scratch']
  %s0 = inlined_call_operand.vmem [shape: s32[3,16,1], index: 0, kind: input, shape index: {}]
  %s1 = inlined_call_operand.vmem [shape: f32[128,32], index: 1, kind: input, shape index: {}]
  %s2 = inlined_call_operand.vmem [shape: f32[1,32], index: 2, kind: input, shape index: {}]
  %s3 = inlined_call_operand.vmem [shape: f32[1,32], index: 3, kind: input, shape index: {}]
  %s4 = inlined_call_operand.hbm [shape: f32[16,32], index: 4, kind: output, shape index: {}]
  %s5 = sld [smem:[#allocation0]]
  $region87: #{tpu_custom_call.1} parent=0
    _
  %s7 = ssub.s32 1, %s5
  %s8 = scalar_select 0, %s7, %s5
  $region1: #{tpu_custom_call.1} parent=0
    #allocation2 [shape = 'u8[24576]{0}', space=vmem, size = 0x6000, scoped, tag = 'input window, operand 0']
    #allocation3 [shape = 'u8[8192]{0}', space=vmem, size = 0x2000, scoped, tag = 'output window, operand 0']
    #allocation4 [shape = 's32[2]{0}', space=sflag, size = 0x8, scoped, tag = 'scoped memory for tpu_custom_call.1']
    %9 = vsyncpa [#allocation4], 0
    %s10 = scalar_lea.sflag [#allocation4], 1
    %11 = vsyncpa %s10, 0
    loop: start=0, step=1, limit=4
    $region2: #{tpu_custom_call.1} parent=1 // loop_pre_header
      _
    $region3: #{tpu_custom_call.1} parent=1 // loop_header
      %s13 = sphi 0, %s17
      %p14 = scmp.ge.s32.totalorder %s13, 4
      %s23 = sphi 0, %s25
      %s26 = sphi 0, %s23
      %s27 = sphi 0, %s26
      %s43 = sphi 0, %s27
      %s47 = sphi 0, %s47
      %s49 = sphi 0, %s47
      %s50 = sphi 0, %s49
      %s64 = sphi 0, %s50
      %s68 = sphi 0, %s68
      %s70 = sphi 0, %s68
      %s71 = sphi 0, %s70
      %s85 = sphi 0, %s71
      %s89 = sphi 0, %s89
      %s91 = sphi 0, %s89
      %s92 = sphi 0, %s91
      %s106 = sphi 0, %s92
      %s112 = sphi 0, %s114
      %s115 = sphi 0, %s112
      %s116 = sphi 0, %s115
      %s132 = sphi 0, %s116
    $region4: #{tpu_custom_call.1} parent=1 // loop_header_branch
      %16 = sbr.rel (%p14) target = $region8
    $region5: #{tpu_custom_call.1} parent=1 // loop_body
      %s18 = ssub.s32 %s13, 1
      %s19 = ssub.s32 %s13, 2
      %s20 = sadd.s32 %s13, 1
      %s21 = ssub.s32 %s13, %s20
      %p22 = scmp.eq.s32.totalorder %s21, 0
      %s24 = sadd.s32 %s23, 1
      %s25 = scalar_select %p22, %s23, %s24
      %p28 = pneg %p22
      %p29 = scmp.eq.s32.totalorder %s13, 1
      %p30 = por %p28, %p29
      %p31 = scmp.ne.s32.totalorder %s23, %s26
      %p32 = scmp.eq.s32.totalorder %s13, 0
      %p33 = por %p31, %p32
      %p34 = scmp.ne.s32.totalorder %s23, %s26
      %p35 = scmp.eq.s32.totalorder %s18, 1
      %p36 = por %p34, %p35
      %p37 = scmp.ne.s32.totalorder %s26, %s27
      %p38 = scmp.eq.s32.totalorder %s18, 0
      %p39 = por %p37, %p38
      %p40 = scmp.ne.s32.totalorder %s26, %s27
      %p41 = scmp.eq.s32.totalorder %s19, 1
      %p42 = por %p40, %p41
      %p44 = scmp.ne.s32.totalorder %s27, %s43
      %p45 = scmp.eq.s32.totalorder %s19, 0
      %p46 = por %p44, %p45
      %s48 = sadd.s32 %s47, 1
      %p51 = scmp.eq.s32.totalorder %s13, 1
      %p52 = scmp.ne.s32.totalorder %s47, %s49
      %p53 = scmp.eq.s32.totalorder %s13, 0
      %p54 = por %p52, %p53
      %p55 = scmp.ne.s32.totalorder %s47, %s49
      %p56 = scmp.eq.s32.totalorder %s18, 1
      %p57 = por %p55, %p56
      %p58 = scmp.ne.s32.totalorder %s49, %s50
      %p59 = scmp.eq.s32.totalorder %s18, 0
      %p60 = por %p58, %p59
      %p61 = scmp.ne.s32.totalorder %s49, %s50
      %p62 = scmp.eq.s32.totalorder %s19, 1
      %p63 = por %p61, %p62
      %p65 = scmp.ne.s32.totalorder %s50, %s64
      %p66 = scmp.eq.s32.totalorder %s19, 0
      %p67 = por %p65, %p66
      %s69 = sadd.s32 %s68, 1
      %p72 = scmp.eq.s32.totalorder %s13, 1
      %p73 = scmp.ne.s32.totalorder %s68, %s70
      %p74 = scmp.eq.s32.totalorder %s13, 0
      %p75 = por %p73, %p74
      %p76 = scmp.ne.s32.totalorder %s68, %s70
      %p77 = scmp.eq.s32.totalorder %s18, 1
      %p78 = por %p76, %p77
      %p79 = scmp.ne.s32.totalorder %s70, %s71
      %p80 = scmp.eq.s32.totalorder %s18, 0
      %p81 = por %p79, %p80
      %p82 = scmp.ne.s32.totalorder %s70, %s71
      %p83 = scmp.eq.s32.totalorder %s19, 1
      %p84 = por %p82, %p83
      %p86 = scmp.ne.s32.totalorder %s71, %s85
      %p87 = scmp.eq.s32.totalorder %s19, 0
      %p88 = por %p86, %p87
      %s90 = sadd.s32 %s89, 1
      %p93 = scmp.eq.s32.totalorder %s13, 1
      %p94 = scmp.ne.s32.totalorder %s89, %s91
      %p95 = scmp.eq.s32.totalorder %s13, 0
      %p96 = por %p94, %p95
      %p97 = scmp.ne.s32.totalorder %s89, %s91
      %p98 = scmp.eq.s32.totalorder %s18, 1
      %p99 = por %p97, %p98
      %p100 = scmp.ne.s32.totalorder %s91, %s92
      %p101 = scmp.eq.s32.totalorder %s18, 0
      %p102 = por %p100, %p101
      %p103 = scmp.ne.s32.totalorder %s91, %s92
      %p104 = scmp.eq.s32.totalorder %s19, 1
      %p105 = por %p103, %p104
      %p107 = scmp.ne.s32.totalorder %s92, %s106
      %p108 = scmp.eq.s32.totalorder %s19, 0
      %p109 = por %p107, %p108
      %s110 = ssub.s32 %s13, %s20
      %p111 = scmp.eq.s32.totalorder %s110, 0
      %s113 = sadd.s32 %s112, 1
      %s114 = scalar_select %p111, %s112, %s113
      %p117 = pneg %p111
      %p118 = scmp.eq.s32.totalorder %s13, 1
      %p119 = por %p117, %p118
      %p120 = scmp.ne.s32.totalorder %s112, %s115
      %p121 = scmp.eq.s32.totalorder %s13, 0
      %p122 = por %p120, %p121
      %p123 = scmp.ne.s32.totalorder %s112, %s115
      %p124 = scmp.eq.s32.totalorder %s18, 1
      %p125 = por %p123, %p124
      %p126 = scmp.ne.s32.totalorder %s115, %s116
      %p127 = scmp.eq.s32.totalorder %s18, 0
      %p128 = por %p126, %p127
      %p129 = scmp.ne.s32.totalorder %s115, %s116
      %p130 = scmp.eq.s32.totalorder %s19, 1
      %p131 = por %p129, %p130
      %p133 = scmp.ne.s32.totalorder %s116, %s132
      %p134 = scmp.eq.s32.totalorder %s19, 0
      %p135 = por %p133, %p134
      %p136 = scmp.le.s32.totalorder 1, %s13
      %p137 = scmp.lt.s32.totalorder %s13, 3
      %p138 = pnand %p136, %p137
      %p139 = pneg %p138
      // Predicated region
      $region9: #{tpu_custom_call.1} parent=5 // pred_check
        _
      $region10: #{tpu_custom_call.1} parent=5 // pred_check_branch
        %141 = sbr.rel (%p138) target = $region12
      $region11: #{tpu_custom_call.1} parent=5 // pred_region
        %s142 = ssub.s32 %s13, 1
        // Predicated region
        $region13: #{tpu_custom_call.1} parent=11 // pred_check
          %p143 = pneg %p60
        $region14: #{tpu_custom_call.1} parent=11 // pred_check_branch
          %145 = sbr.rel (%p143) target = $region16
        $region15: #{tpu_custom_call.1} parent=11 // pred_region
          _
        $region16: #{tpu_custom_call.1} parent=11 // pred_fallthru
          _
        // Predicated region
        $region17: #{tpu_custom_call.1} parent=11 // pred_check
          %p146 = pneg %p81
        $region18: #{tpu_custom_call.1} parent=11 // pred_check_branch
          %148 = sbr.rel (%p146) target = $region20
        $region19: #{tpu_custom_call.1} parent=11 // pred_region
          _
        $region20: #{tpu_custom_call.1} parent=11 // pred_fallthru
          _
        // Predicated region
        $region21: #{tpu_custom_call.1} parent=11 // pred_check
          %p149 = pneg %p102
        $region22: #{tpu_custom_call.1} parent=11 // pred_check_branch
          %151 = sbr.rel (%p149) target = $region24
        $region23: #{tpu_custom_call.1} parent=11 // pred_region
          _
        $region24: #{tpu_custom_call.1} parent=11 // pred_fallthru
          _
      $region12: #{tpu_custom_call.1} parent=5 // pred_fallthru
        _
      %p152 = scmp.lt.s32.totalorder %s13, 2
      // Predicated region
      $region25: #{tpu_custom_call.1} parent=5 // pred_check
        %p153 = pneg %p152
      $region26: #{tpu_custom_call.1} parent=5 // pred_check_branch
        %155 = sbr.rel (%p153) target = $region28
      $region27: #{tpu_custom_call.1} parent=5 // pred_region
        // Predicated region
        $region29: #{tpu_custom_call.1} parent=27 // pred_check
          %p156 = pneg %p33
        $region30: #{tpu_custom_call.1} parent=27 // pred_check_branch
          %158 = sbr.rel (%p156) target = $region32
        $region31: #{tpu_custom_call.1} parent=27 // pred_region
          %s159 = sand.u32 %s23, 1
          %s160 = sand.u32 %s23, 1
          %s161 = smul.addr %s160, 24
          %s162 = scalar_lea.vmem [#allocation2], %s161
          %s163 = smul.addr %s13, 8
          %s164 = scalar_lea.vmem %s0, %s163
          // Predicated region
          $region33: #{tpu_custom_call.1} parent=31 // pred_check
            _
          $region34: #{tpu_custom_call.1} parent=31 // pred_check_branch
            %166 = sbr.rel (0) target = $region36
          $region35: #{tpu_custom_call.1} parent=31 // pred_region
            // Predicated region
            $region37: #{tpu_custom_call.1} parent=35 // pred_check
              _
            $region38: #{tpu_custom_call.1} parent=35 // pred_check_branch
              %168 = sbr.rel (0) target = $region40
            $region39: #{tpu_custom_call.1} parent=35 // pred_region
              // Predicated region
              $region52: #{tpu_custom_call.1} parent=39 // pred_check
                _
              $region53: #{tpu_custom_call.1} parent=39 // pred_check_branch
                %188 = sbr.rel (0) target = $region55
              $region54: #{tpu_custom_call.1} parent=39 // pred_region
                loop: start=0, step=1, limit=1
                $region56: #{tpu_custom_call.1} parent=54 // loop_pre_header
                  _
                $region57: #{tpu_custom_call.1} parent=54 // loop_header
                  %s190 = sphi 0, %s194
                  %p191 = scmp.ge.s32.totalorder %s190, 1
                  %s195 = sphi %s164, %s164
                  %s196 = sphi %s162, %s162
                $region58: #{tpu_custom_call.1} parent=54 // loop_header_branch
                  %193 = sbr.rel (%p191) target = $region62
                $region59: #{tpu_custom_call.1} parent=54 // loop_body
                  %v197 = vld [vmem:[%s195] sm:$0xff]
                  %198 = vst [vmem:[%s196] sm:$0xff] %v197
                  %v199 = vld [vmem:[%s195 + $0x10] sm:$0xff]
                  %200 = vst [vmem:[%s196 + $0x8] sm:$0xff] %v199
                  %v201 = vld [vmem:[%s195 + $0x20] sm:$0xff]
                  %202 = vst [vmem:[%s196 + $0x10] sm:$0xff] %v201
                $region60: #{tpu_custom_call.1} parent=54 // loop_footer
                  %s194 = sadd.s32 1, %s190
                $region61: #{tpu_custom_call.1} parent=54 // loop_footer_branch
                  %189 = sbr.rel target = $region57
                $region62: #{tpu_custom_call.1} parent=54 // loop_exit
                  _
              $region55: #{tpu_custom_call.1} parent=39 // pred_fallthru
                _
              // Predicated region
              $region63: #{tpu_custom_call.1} parent=39 // pred_check
                _
              $region64: #{tpu_custom_call.1} parent=39 // pred_check_branch
                %204 = sbr.rel target = $region66
              $region65: #{tpu_custom_call.1} parent=39 // pred_region
                _
              $region66: #{tpu_custom_call.1} parent=39 // pred_fallthru
                _
            $region40: #{tpu_custom_call.1} parent=35 // pred_fallthru
              _
            // Predicated region
            $region41: #{tpu_custom_call.1} parent=35 // pred_check
              _
            $region42: #{tpu_custom_call.1} parent=35 // pred_check_branch
              %170 = sbr.rel target = $region44
            $region43: #{tpu_custom_call.1} parent=35 // pred_region
              %s172 = ssub.s32 256, 1
              loop: start=0, step=1, limit=1
              $region45: #{tpu_custom_call.1} parent=43 // loop_pre_header
                _
              $region46: #{tpu_custom_call.1} parent=43 // loop_header
                %s174 = sphi 0, %s178
                %p175 = scmp.ge.s32.totalorder %s174, 1
                %s179 = sphi %s164, %s164
                %s180 = sphi %s162, %s162
              $region47: #{tpu_custom_call.1} parent=43 // loop_header_branch
                %177 = sbr.rel (%p175) target = $region51
              $region48: #{tpu_custom_call.1} parent=43 // loop_body
                %v181 = vld [vmem:[%s179] sm:%s172]
                %182 = vst [vmem:[%s180] sm:%s172] %v181
                %v183 = vld [vmem:[%s179 + $0x10] sm:%s172]
                %184 = vst [vmem:[%s180 + $0x8] sm:%s172] %v183
                %v185 = vld [vmem:[%s179 + $0x20] sm:%s172]
                %186 = vst [vmem:[%s180 + $0x10] sm:%s172] %v185
              $region49: #{tpu_custom_call.1} parent=43 // loop_footer
                %s178 = sadd.s32 1, %s174
              $region50: #{tpu_custom_call.1} parent=43 // loop_footer_branch
                %173 = sbr.rel target = $region46
              $region51: #{tpu_custom_call.1} parent=43 // loop_exit
                _
            $region44: #{tpu_custom_call.1} parent=35 // pred_fallthru
              _
          $region36: #{tpu_custom_call.1} parent=31 // pred_fallthru
            _
          %205 = vnop
        $region32: #{tpu_custom_call.1} parent=27 // pred_fallthru
          _
      $region28: #{tpu_custom_call.1} parent=5 // pred_fallthru
        _
      %p206 = scmp.le.s32.totalorder 1, %s13
      %p207 = scmp.lt.s32.totalorder %s13, 3
      %p208 = pnand %p206, %p207
      %p209 = pneg %p208
      // Predicated region
      $region67: #{tpu_custom_call.1} parent=5 // pred_check
        _
      $region68: #{tpu_custom_call.1} parent=5 // pred_check_branch
        %211 = sbr.rel (%p208) target = $region70
      $region69: #{tpu_custom_call.1} parent=5 // pred_region
        %s212 = ssub.s32 %s13, 1
        %s213 = sand.u32 %s26, 1
        %s214 = sand.u32 %s26, 1
        %s215 = smul.addr %s214, 24
        %s216 = scalar_lea.vmem [#allocation2], %s215
        // Predicated region
        $region71: #{tpu_custom_call.1} parent=69 // pred_check
          %p217 = pneg %p39
        $region72: #{tpu_custom_call.1} parent=69 // pred_check_branch
          %219 = sbr.rel (%p217) target = $region74
        $region73: #{tpu_custom_call.1} parent=69 // pred_region
          _
        $region74: #{tpu_custom_call.1} parent=69 // pred_fallthru
          _
        %s220 = sand.u32 %s26, 1
        %s221 = sand.u32 %s26, 1
        %s222 = smul.addr %s221, 24
        %s223 = scalar_lea.vmem [#allocation2], %s222
        %p224 = pneg %p39
        %p225 = pneg %p36
        %p226 = pneg %p60
        %p227 = pneg %p57
        %p228 = pneg %p81
        %p229 = pneg %p78
        %p230 = pneg %p102
        %p231 = pneg %p99
        %p232 = pneg %p128
        %p233 = pneg %p125
        %s234 = sand.u32 %s115, 1
        %s235 = scalar_lea.sflag [#allocation4], %s234
        %s236 = sand.u32 %s115, 1
        %s237 = smul.addr %s236, 8
        %s238 = scalar_lea.vmem [#allocation3], %s237
        %v239 = vld [vmem:[%s216] sm:$0xff]
        %s240 = scalar_lea.vmem %s216, 8 [#allocation2]
        %v241 = vld [vmem:[%s240] sm:$0xff]
        %s242 = scalar_lea.vmem %s216, 16 [#allocation2]
        %v243 = vld [vmem:[%s242] sm:$0xff]
        %v244 = vlaneseq
        %v245 = vand.u32 %v244, 127
        %246 = vset.pattern.permute.xlu0 0
        %247 = vperm.xlu0 %246, %v239
        %v248 = vpop.permute.xlu0 %247
        %vm249 = vcmp.eq.s32.totalorder %v245, %v248
        %250 = vset.pattern.permute.xlu0 0
        %251 = vperm.xlu0 %250, %v241
        %v252 = vpop.permute.xlu0 %251
        %vm253 = vcmp.eq.s32.totalorder %v245, %v252
        %vm254 = vmor %vm249, %vm253
        %255 = vset.pattern.permute.xlu0 0
        %256 = vperm.xlu0 %255, %v243
        %v257 = vpop.permute.xlu0 %256
        %vm258 = vcmp.eq.s32.totalorder %v245, %v257
        %vm259 = vmor %vm254, %vm258
        %v260 = vsel %vm259, 1, 0
        %v261 = vcvt.s32.f32 %v260
        %v262 = vld [vmem:[%s1] sm:$0xff]
        %v263 = vld [vmem:[%s1 + $0x8] sm:$0xff]
        %v264 = vld [vmem:[%s1 + $0x10] sm:$0xff]
        %v265 = vld [vmem:[%s1 + $0x18] sm:$0xff]
        %v266 = vld [vmem:[%s1 + $0x20] sm:$0xff]
        %v267 = vld [vmem:[%s1 + $0x28] sm:$0xff]
        %v268 = vld [vmem:[%s1 + $0x30] sm:$0xff]
        %v269 = vld [vmem:[%s1 + $0x38] sm:$0xff]
        %v270 = vld [vmem:[%s1 + $0x40] sm:$0xff]
        %v271 = vld [vmem:[%s1 + $0x48] sm:$0xff]
        %v272 = vld [vmem:[%s1 + $0x50] sm:$0xff]
        %v273 = vld [vmem:[%s1 + $0x58] sm:$0xff]
        %v274 = vld [vmem:[%s1 + $0x60] sm:$0xff]
        %v275 = vld [vmem:[%s1 + $0x68] sm:$0xff]
        %v276 = vld [vmem:[%s1 + $0x70] sm:$0xff]
        %v277 = vld [vmem:[%s1 + $0x78] sm:$0xff]
        %278 = vmatprep.subr.mxu0 0.0
        %v279 = vand.u32 %v277, 4294901760
        %280 = vmatpush1.msra.mxu0 %v279
        %281 = vmatprep.subr.mxu0 0.0
        %v282 = vand.u32 %v276, 4294901760
        %283 = vmatpush1.msra.mxu0 %v282
        %284 = vmatprep.subr.mxu0 0.0
        %v285 = vand.u32 %v275, 4294901760
        %286 = vmatpush1.msra.mxu0 %v285
        %287 = vmatprep.subr.mxu0 0.0
        %v288 = vand.u32 %v274, 4294901760
        %289 = vmatpush1.msra.mxu0 %v288
        %290 = vmatprep.subr.mxu0 0.0
        %v291 = vand.u32 %v273, 4294901760
        %292 = vmatpush1.msra.mxu0 %v291
        %293 = vmatprep.subr.mxu0 0.0
        %v294 = vand.u32 %v272, 4294901760
        %295 = vmatpush1.msra.mxu0 %v294
        %296 = vmatprep.subr.mxu0 0.0
        %v297 = vand.u32 %v271, 4294901760
        %298 = vmatpush1.msra.mxu0 %v297
        %299 = vmatprep.subr.mxu0 0.0
        %v300 = vand.u32 %v270, 4294901760
        %301 = vmatpush1.msra.mxu0 %v300
        %302 = vmatprep.subr.mxu0 0.0
        %v303 = vand.u32 %v269, 4294901760
        %304 = vmatpush1.msra.mxu0 %v303
        %305 = vmatprep.subr.mxu0 0.0
        %v306 = vand.u32 %v268, 4294901760
        %307 = vmatpush1.msra.mxu0 %v306
        %308 = vmatprep.subr.mxu0 0.0
        %v309 = vand.u32 %v267, 4294901760
        %310 = vmatpush1.msra.mxu0 %v309
        %311 = vmatprep.subr.mxu0 0.0
        %v312 = vand.u32 %v266, 4294901760
        %313 = vmatpush1.msra.mxu0 %v312
        %314 = vmatprep.subr.mxu0 0.0
        %v315 = vand.u32 %v265, 4294901760
        %316 = vmatpush1.msra.mxu0 %v315
        %317 = vmatprep.subr.mxu0 0.0
        %v318 = vand.u32 %v264, 4294901760
        %319 = vmatpush1.msra.mxu0 %v318
        %320 = vmatprep.subr.mxu0 0.0
        %v321 = vand.u32 %v263, 4294901760
        %322 = vmatpush1.msra.mxu0 %v321
        %323 = vmatprep.subr.mxu0 0.0
        %v324 = vand.u32 %v262, 4294901760
        %325 = vmatpush1.msra.mxu0 %v324
        %326 = vmatprep.subr.mxu0 0.0
        %327 = vmatpush2.msra.mxu0 0.0
        %328 = vmatprep.subr.mxu0 0.0
        %329 = vmatpush2.msra.mxu0 0.0
        %330 = vmatprep.subr.mxu0 0.0
        %331 = vmatpush2.msra.mxu0 0.0
        %332 = vmatprep.subr.mxu0 0.0
        %333 = vmatpush2.msra.mxu0 0.0
        %334 = vmatprep.subr.mxu0 0.0
        %335 = vmatpush2.msra.mxu0 0.0
        %336 = vmatprep.subr.mxu0 0.0
        %337 = vmatpush2.msra.mxu0 0.0
        %338 = vmatprep.subr.mxu0 0.0
        %339 = vmatpush2.msra.mxu0 0.0
        %340 = vmatprep.subr.mxu0 0.0
        %341 = vmatpush2.msra.mxu0 0.0
        %342 = vmatprep.subr.mxu0 0.0
        %343 = vmatpush2.msra.mxu0 0.0
        %344 = vmatprep.subr.mxu0 0.0
        %345 = vmatpush2.msra.mxu0 0.0
        %346 = vmatprep.subr.mxu0 0.0
        %347 = vmatpush2.msra.mxu0 0.0
        %348 = vmatprep.subr.mxu0 0.0
        %349 = vmatpush2.msra.mxu0 0.0
        %350 = vmatprep.subr.mxu0 0.0
        %351 = vmatpush2.msra.mxu0 0.0
        %352 = vmatprep.subr.mxu0 0.0
        %353 = vmatpush2.msra.mxu0 0.0
        %354 = vmatprep.subr.mxu0 0.0
        %355 = vmatpush2.msra.mxu0 0.0
        %356 = vmatprep.subr.mxu0 0.0
        %357 = vmatpush2.msra.mxu0 0.0
        %358 = vmatprep.mubr.f32.mxu0 0.0
        %v359 = vand.u32 %v261, 4294901760
        %v360 = vsub.f32 %v261, %v359
        %v361 = vand.u32 %v360, 4294901760
        %v362 = vsub.f32 %v360, %v361
        %v363 = vand.u32 %v362, 4294901760
        %364 = vmatmul.mubr.f32.gmra.mxu0 %v363
        %v365 = vpop.f32.mrf.mxu0
        %v366 = vadd.f32 0.0, %v365
        %v367 = vpop.f32.mrf.mxu0
        %368 = vdwg.mxu0
        %369 = vmatprep.subr.mxu0 0.0
        %v370 = vand.u32 %v277, 4294901760
        %v371 = vsub.f32 %v277, %v370
        %v372 = vand.u32 %v371, 4294901760
        %v373 = vsub.f32 %v371, %v372
        %v374 = vand.u32 %v373, 4294901760
        %375 = vmatpush1.msra.mxu0 %v374
        %376 = vmatprep.subr.mxu0 0.0
        %v377 = vand.u32 %v276, 4294901760
        %v378 = vsub.f32 %v276, %v377
        %v379 = vand.u32 %v378, 4294901760
        %v380 = vsub.f32 %v378, %v379
        %v381 = vand.u32 %v380, 4294901760
        %382 = vmatpush1.msra.mxu0 %v381
        %383 = vmatprep.subr.mxu0 0.0
        %v384 = vand.u32 %v275, 4294901760
        %v385 = vsub.f32 %v275, %v384
        %v386 = vand.u32 %v385, 4294901760
        %v387 = vsub.f32 %v385, %v386
        %v388 = vand.u32 %v387, 4294901760
        %389 = vmatpush1.msra.mxu0 %v388
        %390 = vmatprep.subr.mxu0 0.0
        %v391 = vand.u32 %v274, 4294901760
        %v392 = vsub.f32 %v274, %v391
        %v393 = vand.u32 %v392, 4294901760
        %v394 = vsub.f32 %v392, %v393
        %v395 = vand.u32 %v394, 4294901760
        %396 = vmatpush1.msra.mxu0 %v395
        %397 = vmatprep.subr.mxu0 0.0
        %v398 = vand.u32 %v273, 4294901760
        %v399 = vsub.f32 %v273, %v398
        %v400 = vand.u32 %v399, 4294901760
        %v401 = vsub.f32 %v399, %v400
        %v402 = vand.u32 %v401, 4294901760
        %403 = vmatpush1.msra.mxu0 %v402
        %404 = vmatprep.subr.mxu0 0.0
        %v405 = vand.u32 %v272, 4294901760
        %v406 = vsub.f32 %v272, %v405
        %v407 = vand.u32 %v406, 4294901760
        %v408 = vsub.f32 %v406, %v407
        %v409 = vand.u32 %v408, 4294901760
        %410 = vmatpush1.msra.mxu0 %v409
        %411 = vmatprep.subr.mxu0 0.0
        %v412 = vand.u32 %v271, 4294901760
        %v413 = vsub.f32 %v271, %v412
        %v414 = vand.u32 %v413, 4294901760
        %v415 = vsub.f32 %v413, %v414
        %v416 = vand.u32 %v415, 4294901760
        %417 = vmatpush1.msra.mxu0 %v416
        %418 = vmatprep.subr.mxu0 0.0
        %v419 = vand.u32 %v270, 4294901760
        %v420 = vsub.f32 %v270, %v419
        %v421 = vand.u32 %v420, 4294901760
        %v422 = vsub.f32 %v420, %v421
        %v423 = vand.u32 %v422, 4294901760
        %424 = vmatpush1.msra.mxu0 %v423
        %425 = vmatprep.subr.mxu0 0.0
        %v426 = vand.u32 %v269, 4294901760
        %v427 = vsub.f32 %v269, %v426
        %v428 = vand.u32 %v427, 4294901760
        %v429 = vsub.f32 %v427, %v428
        %v430 = vand.u32 %v429, 4294901760
        %431 = vmatpush1.msra.mxu0 %v430
        %432 = vmatprep.subr.mxu0 0.0
        %v433 = vand.u32 %v268, 4294901760
        %v434 = vsub.f32 %v268, %v433
        %v435 = vand.u32 %v434, 4294901760
        %v436 = vsub.f32 %v434, %v435
        %v437 = vand.u32 %v436, 4294901760
        %438 = vmatpush1.msra.mxu0 %v437
        %439 = vmatprep.subr.mxu0 0.0
        %v440 = vand.u32 %v267, 4294901760
        %v441 = vsub.f32 %v267, %v440
        %v442 = vand.u32 %v441, 4294901760
        %v443 = vsub.f32 %v441, %v442
        %v444 = vand.u32 %v443, 4294901760
        %445 = vmatpush1.msra.mxu0 %v444
        %446 = vmatprep.subr.mxu0 0.0
        %v447 = vand.u32 %v266, 4294901760
        %v448 = vsub.f32 %v266, %v447
        %v449 = vand.u32 %v448, 4294901760
        %v450 = vsub.f32 %v448, %v449
        %v451 = vand.u32 %v450, 4294901760
        %452 = vmatpush1.msra.mxu0 %v451
        %453 = vmatprep.subr.mxu0 0.0
        %v454 = vand.u32 %v265, 4294901760
        %v455 = vsub.f32 %v265, %v454
        %v456 = vand.u32 %v455, 4294901760
        %v457 = vsub.f32 %v455, %v456
        %v458 = vand.u32 %v457, 4294901760
        %459 = vmatpush1.msra.mxu0 %v458
        %460 = vmatprep.subr.mxu0 0.0
        %v461 = vand.u32 %v264, 4294901760
        %v462 = vsub.f32 %v264, %v461
        %v463 = vand.u32 %v462, 4294901760
        %v464 = vsub.f32 %v462, %v463
        %v465 = vand.u32 %v464, 4294901760
        %466 = vmatpush1.msra.mxu0 %v465
        %467 = vmatprep.subr.mxu0 0.0
        %v468 = vand.u32 %v263, 4294901760
        %v469 = vsub.f32 %v263, %v468
        %v470 = vand.u32 %v469, 4294901760
        %v471 = vsub.f32 %v469, %v470
        %v472 = vand.u32 %v471, 4294901760
        %473 = vmatpush1.msra.mxu0 %v472
        %474 = vmatprep.subr.mxu0 0.0
        %v475 = vand.u32 %v262, 4294901760
        %v476 = vsub.f32 %v262, %v475
        %v477 = vand.u32 %v476, 4294901760
        %v478 = vsub.f32 %v476, %v477
        %v479 = vand.u32 %v478, 4294901760
        %480 = vmatpush1.msra.mxu0 %v479
        %481 = vmatprep.subr.mxu0 0.0
        %482 = vmatpush2.msra.mxu0 0.0
        %483 = vmatprep.subr.mxu0 0.0
        %484 = vmatpush2.msra.mxu0 0.0
        %485 = vmatprep.subr.mxu0 0.0
        %486 = vmatpush2.msra.mxu0 0.0
        %487 = vmatprep.subr.mxu0 0.0
        %488 = vmatpush2.msra.mxu0 0.0
        %489 = vmatprep.subr.mxu0 0.0
        %490 = vmatpush2.msra.mxu0 0.0
        %491 = vmatprep.subr.mxu0 0.0
        %492 = vmatpush2.msra.mxu0 0.0
        %493 = vmatprep.subr.mxu0 0.0
        %494 = vmatpush2.msra.mxu0 0.0
        %495 = vmatprep.subr.mxu0 0.0
        %496 = vmatpush2.msra.mxu0 0.0
        %497 = vmatprep.subr.mxu0 0.0
        %498 = vmatpush2.msra.mxu0 0.0
        %499 = vmatprep.subr.mxu0 0.0
        %500 = vmatpush2.msra.mxu0 0.0
        %501 = vmatprep.subr.mxu0 0.0
        %502 = vmatpush2.msra.mxu0 0.0
        %503 = vmatprep.subr.mxu0 0.0
        %504 = vmatpush2.msra.mxu0 0.0
        %505 = vmatprep.subr.mxu0 0.0
        %506 = vmatpush2.msra.mxu0 0.0
        %507 = vmatprep.subr.mxu0 0.0
        %508 = vmatpush2.msra.mxu0 0.0
        %509 = vmatprep.subr.mxu0 0.0
        %510 = vmatpush2.msra.mxu0 0.0
        %511 = vmatprep.subr.mxu0 0.0
        %512 = vmatpush2.msra.mxu0 0.0
        %513 = vmatprep.mubr.f32.mxu0 0.0
        %v514 = vand.u32 %v261, 4294901760
        %515 = vmatmul.mubr.f32.gmra.mxu0 %v514
        %v516 = vpop.f32.mrf.mxu0
        %v517 = vadd.f32 %v366, %v516
        %v518 = vpop.f32.mrf.mxu0
        %519 = vdwg.mxu0
        %520 = vmatprep.subr.mxu0 0.0
        %v521 = vand.u32 %v277, 4294901760
        %v522 = vsub.f32 %v277, %v521
        %523 = vmatpush1.msra.mxu0 %v522
        %524 = vmatprep.subr.mxu0 0.0
        %v525 = vand.u32 %v276, 4294901760
        %v526 = vsub.f32 %v276, %v525
        %527 = vmatpush1.msra.mxu0 %v526
        %528 = vmatprep.subr.mxu0 0.0
        %v529 = vand.u32 %v275, 4294901760
        %v530 = vsub.f32 %v275, %v529
        %531 = vmatpush1.msra.mxu0 %v530
        %532 = vmatprep.subr.mxu0 0.0
        %v533 = vand.u32 %v274, 4294901760
        %v534 = vsub.f32 %v274, %v533
        %535 = vmatpush1.msra.mxu0 %v534
        %536 = vmatprep.subr.mxu0 0.0
        %v537 = vand.u32 %v273, 4294901760
        %v538 = vsub.f32 %v273, %v537
        %539 = vmatpush1.msra.mxu0 %v538
        %540 = vmatprep.subr.mxu0 0.0
        %v541 = vand.u32 %v272, 4294901760
        %v542 = vsub.f32 %v272, %v541
        %543 = vmatpush1.msra.mxu0 %v542
        %544 = vmatprep.subr.mxu0 0.0
        %v545 = vand.u32 %v271, 4294901760
        %v546 = vsub.f32 %v271, %v545
        %547 = vmatpush1.msra.mxu0 %v546
        %548 = vmatprep.subr.mxu0 0.0
        %v549 = vand.u32 %v270, 4294901760
        %v550 = vsub.f32 %v270, %v549
        %551 = vmatpush1.msra.mxu0 %v550
        %552 = vmatprep.subr.mxu0 0.0
        %v553 = vand.u32 %v269, 4294901760
        %v554 = vsub.f32 %v269, %v553
        %555 = vmatpush1.msra.mxu0 %v554
        %556 = vmatprep.subr.mxu0 0.0
        %v557 = vand.u32 %v268, 4294901760
        %v558 = vsub.f32 %v268, %v557
        %559 = vmatpush1.msra.mxu0 %v558
        %560 = vmatprep.subr.mxu0 0.0
        %v561 = vand.u32 %v267, 4294901760
        %v562 = vsub.f32 %v267, %v561
        %563 = vmatpush1.msra.mxu0 %v562
        %564 = vmatprep.subr.mxu0 0.0
        %v565 = vand.u32 %v266, 4294901760
        %v566 = vsub.f32 %v266, %v565
        %567 = vmatpush1.msra.mxu0 %v566
        %568 = vmatprep.subr.mxu0 0.0
        %v569 = vand.u32 %v265, 4294901760
        %v570 = vsub.f32 %v265, %v569
        %571 = vmatpush1.msra.mxu0 %v570
        %572 = vmatprep.subr.mxu0 0.0
        %v573 = vand.u32 %v264, 4294901760
        %v574 = vsub.f32 %v264, %v573
        %575 = vmatpush1.msra.mxu0 %v574
        %576 = vmatprep.subr.mxu0 0.0
        %v577 = vand.u32 %v263, 4294901760
        %v578 = vsub.f32 %v263, %v577
        %579 = vmatpush1.msra.mxu0 %v578
        %580 = vmatprep.subr.mxu0 0.0
        %v581 = vand.u32 %v262, 4294901760
        %v582 = vsub.f32 %v262, %v581
        %583 = vmatpush1.msra.mxu0 %v582
        %584 = vmatprep.subr.mxu0 0.0
        %585 = vmatpush2.msra.mxu0 0.0
        %586 = vmatprep.subr.mxu0 0.0
        %587 = vmatpush2.msra.mxu0 0.0
        %588 = vmatprep.subr.mxu0 0.0
        %589 = vmatpush2.msra.mxu0 0.0
        %590 = vmatprep.subr.mxu0 0.0
        %591 = vmatpush2.msra.mxu0 0.0
        %592 = vmatprep.subr.mxu0 0.0
        %593 = vmatpush2.msra.mxu0 0.0
        %594 = vmatprep.subr.mxu0 0.0
        %595 = vmatpush2.msra.mxu0 0.0
        %596 = vmatprep.subr.mxu0 0.0
        %597 = vmatpush2.msra.mxu0 0.0
        %598 = vmatprep.subr.mxu0 0.0
        %599 = vmatpush2.msra.mxu0 0.0
        %600 = vmatprep.subr.mxu0 0.0
        %601 = vmatpush2.msra.mxu0 0.0
        %602 = vmatprep.subr.mxu0 0.0
        %603 = vmatpush2.msra.mxu0 0.0
        %604 = vmatprep.subr.mxu0 0.0
        %605 = vmatpush2.msra.mxu0 0.0
        %606 = vmatprep.subr.mxu0 0.0
        %607 = vmatpush2.msra.mxu0 0.0
        %608 = vmatprep.subr.mxu0 0.0
        %609 = vmatpush2.msra.mxu0 0.0
        %610 = vmatprep.subr.mxu0 0.0
        %611 = vmatpush2.msra.mxu0 0.0
        %612 = vmatprep.subr.mxu0 0.0
        %613 = vmatpush2.msra.mxu0 0.0
        %614 = vmatprep.subr.mxu0 0.0
        %615 = vmatpush2.msra.mxu0 0.0
        %616 = vmatprep.mubr.f32.mxu0 0.0
        %v617 = vand.u32 %v261, 4294901760
        %v618 = vsub.f32 %v261, %v617
        %619 = vmatmul.mubr.f32.gmra.mxu0 %v618
        %v620 = vpop.f32.mrf.mxu0
        %v621 = vadd.f32 %v517, %v620
        %v622 = vpop.f32.mrf.mxu0
        %623 = vdwg.mxu0
        %624 = vmatprep.subr.mxu0 0.0
        %v625 = vand.u32 %v277, 4294901760
        %626 = vmatpush1.msra.mxu0 %v625
        %627 = vmatprep.subr.mxu0 0.0
        %v628 = vand.u32 %v276, 4294901760
        %629 = vmatpush1.msra.mxu0 %v628
        %630 = vmatprep.subr.mxu0 0.0
        %v631 = vand.u32 %v275, 4294901760
        %632 = vmatpush1.msra.mxu0 %v631
        %633 = vmatprep.subr.mxu0 0.0
        %v634 = vand.u32 %v274, 4294901760
        %635 = vmatpush1.msra.mxu0 %v634
        %636 = vmatprep.subr.mxu0 0.0
        %v637 = vand.u32 %v273, 4294901760
        %638 = vmatpush1.msra.mxu0 %v637
        %639 = vmatprep.subr.mxu0 0.0
        %v640 = vand.u32 %v272, 4294901760
        %641 = vmatpush1.msra.mxu0 %v640
        %642 = vmatprep.subr.mxu0 0.0
        %v643 = vand.u32 %v271, 4294901760
        %644 = vmatpush1.msra.mxu0 %v643
        %645 = vmatprep.subr.mxu0 0.0
        %v646 = vand.u32 %v270, 4294901760
        %647 = vmatpush1.msra.mxu0 %v646
        %648 = vmatprep.subr.mxu0 0.0
        %v649 = vand.u32 %v269, 4294901760
        %650 = vmatpush1.msra.mxu0 %v649
        %651 = vmatprep.subr.mxu0 0.0
        %v652 = vand.u32 %v268, 4294901760
        %653 = vmatpush1.msra.mxu0 %v652
        %654 = vmatprep.subr.mxu0 0.0
        %v655 = vand.u32 %v267, 4294901760
        %656 = vmatpush1.msra.mxu0 %v655
        %657 = vmatprep.subr.mxu0 0.0
        %v658 = vand.u32 %v266, 4294901760
        %659 = vmatpush1.msra.mxu0 %v658
        %660 = vmatprep.subr.mxu0 0.0
        %v661 = vand.u32 %v265, 4294901760
        %662 = vmatpush1.msra.mxu0 %v661
        %663 = vmatprep.subr.mxu0 0.0
        %v664 = vand.u32 %v264, 4294901760
        %665 = vmatpush1.msra.mxu0 %v664
        %666 = vmatprep.subr.mxu0 0.0
        %v667 = vand.u32 %v263, 4294901760
        %668 = vmatpush1.msra.mxu0 %v667
        %669 = vmatprep.subr.mxu0 0.0
        %v670 = vand.u32 %v262, 4294901760
        %671 = vmatpush1.msra.mxu0 %v670
        %672 = vmatprep.subr.mxu0 0.0
        %673 = vmatpush2.msra.mxu0 0.0
        %674 = vmatprep.subr.mxu0 0.0
        %675 = vmatpush2.msra.mxu0 0.0
        %676 = vmatprep.subr.mxu0 0.0
        %677 = vmatpush2.msra.mxu0 0.0
        %678 = vmatprep.subr.mxu0 0.0
        %679 = vmatpush2.msra.mxu0 0.0
        %680 = vmatprep.subr.mxu0 0.0
        %681 = vmatpush2.msra.mxu0 0.0
        %682 = vmatprep.subr.mxu0 0.0
        %683 = vmatpush2.msra.mxu0 0.0
        %684 = vmatprep.subr.mxu0 0.0
        %685 = vmatpush2.msra.mxu0 0.0
        %686 = vmatprep.subr.mxu0 0.0
        %687 = vmatpush2.msra.mxu0 0.0
        %688 = vmatprep.subr.mxu0 0.0
        %689 = vmatpush2.msra.mxu0 0.0
        %690 = vmatprep.subr.mxu0 0.0
        %691 = vmatpush2.msra.mxu0 0.0
        %692 = vmatprep.subr.mxu0 0.0
        %693 = vmatpush2.msra.mxu0 0.0
        %694 = vmatprep.subr.mxu0 0.0
        %695 = vmatpush2.msra.mxu0 0.0
        %696 = vmatprep.subr.mxu0 0.0
        %697 = vmatpush2.msra.mxu0 0.0
        %698 = vmatprep.subr.mxu0 0.0
        %699 = vmatpush2.msra.mxu0 0.0
        %700 = vmatprep.subr.mxu0 0.0
        %701 = vmatpush2.msra.mxu0 0.0
        %702 = vmatprep.subr.mxu0 0.0
        %703 = vmatpush2.msra.mxu0 0.0
        %704 = vmatprep.mubr.f32.mxu0 0.0
        %v705 = vand.u32 %v261, 4294901760
        %v706 = vsub.f32 %v261, %v705
        %v707 = vand.u32 %v706, 4294901760
        %708 = vmatmul.mubr.f32.gmra.mxu0 %v707
        %v709 = vpop.f32.mrf.mxu0
        %v710 = vadd.f32 %v621, %v709
        %v711 = vpop.f32.mrf.mxu0
        %712 = vdwg.mxu0
        %713 = vmatprep.subr.mxu0 0.0
        %v714 = vand.u32 %v277, 4294901760
        %v715 = vsub.f32 %v277, %v714
        %v716 = vand.u32 %v715, 4294901760
        %717 = vmatpush1.msra.mxu0 %v716
        %718 = vmatprep.subr.mxu0 0.0
        %v719 = vand.u32 %v276, 4294901760
        %v720 = vsub.f32 %v276, %v719
        %v721 = vand.u32 %v720, 4294901760
        %722 = vmatpush1.msra.mxu0 %v721
        %723 = vmatprep.subr.mxu0 0.0
        %v724 = vand.u32 %v275, 4294901760
        %v725 = vsub.f32 %v275, %v724
        %v726 = vand.u32 %v725, 4294901760
        %727 = vmatpush1.msra.mxu0 %v726
        %728 = vmatprep.subr.mxu0 0.0
        %v729 = vand.u32 %v274, 4294901760
        %v730 = vsub.f32 %v274, %v729
        %v731 = vand.u32 %v730, 4294901760
        %732 = vmatpush1.msra.mxu0 %v731
        %733 = vmatprep.subr.mxu0 0.0
        %v734 = vand.u32 %v273, 4294901760
        %v735 = vsub.f32 %v273, %v734
        %v736 = vand.u32 %v735, 4294901760
        %737 = vmatpush1.msra.mxu0 %v736
        %738 = vmatprep.subr.mxu0 0.0
        %v739 = vand.u32 %v272, 4294901760
        %v740 = vsub.f32 %v272, %v739
        %v741 = vand.u32 %v740, 4294901760
        %742 = vmatpush1.msra.mxu0 %v741
        %743 = vmatprep.subr.mxu0 0.0
        %v744 = vand.u32 %v271, 4294901760
        %v745 = vsub.f32 %v271, %v744
        %v746 = vand.u32 %v745, 4294901760
        %747 = vmatpush1.msra.mxu0 %v746
        %748 = vmatprep.subr.mxu0 0.0
        %v749 = vand.u32 %v270, 4294901760
        %v750 = vsub.f32 %v270, %v749
        %v751 = vand.u32 %v750, 4294901760
        %752 = vmatpush1.msra.mxu0 %v751
        %753 = vmatprep.subr.mxu0 0.0
        %v754 = vand.u32 %v269, 4294901760
        %v755 = vsub.f32 %v269, %v754
        %v756 = vand.u32 %v755, 4294901760
        %757 = vmatpush1.msra.mxu0 %v756
        %758 = vmatprep.subr.mxu0 0.0
        %v759 = vand.u32 %v268, 4294901760
        %v760 = vsub.f32 %v268, %v759
        %v761 = vand.u32 %v760, 4294901760
        %762 = vmatpush1.msra.mxu0 %v761
        %763 = vmatprep.subr.mxu0 0.0
        %v764 = vand.u32 %v267, 4294901760
        %v765 = vsub.f32 %v267, %v764
        %v766 = vand.u32 %v765, 4294901760
        %767 = vmatpush1.msra.mxu0 %v766
        %768 = vmatprep.subr.mxu0 0.0
        %v769 = vand.u32 %v266, 4294901760
        %v770 = vsub.f32 %v266, %v769
        %v771 = vand.u32 %v770, 4294901760
        %772 = vmatpush1.msra.mxu0 %v771
        %773 = vmatprep.subr.mxu0 0.0
        %v774 = vand.u32 %v265, 4294901760
        %v775 = vsub.f32 %v265, %v774
        %v776 = vand.u32 %v775, 4294901760
        %777 = vmatpush1.msra.mxu0 %v776
        %778 = vmatprep.subr.mxu0 0.0
        %v779 = vand.u32 %v264, 4294901760
        %v780 = vsub.f32 %v264, %v779
        %v781 = vand.u32 %v780, 4294901760
        %782 = vmatpush1.msra.mxu0 %v781
        %783 = vmatprep.subr.mxu0 0.0
        %v784 = vand.u32 %v263, 4294901760
        %v785 = vsub.f32 %v263, %v784
        %v786 = vand.u32 %v785, 4294901760
        %787 = vmatpush1.msra.mxu0 %v786
        %788 = vmatprep.subr.mxu0 0.0
        %v789 = vand.u32 %v262, 4294901760
        %v790 = vsub.f32 %v262, %v789
        %v791 = vand.u32 %v790, 4294901760
        %792 = vmatpush1.msra.mxu0 %v791
        %793 = vmatprep.subr.mxu0 0.0
        %794 = vmatpush2.msra.mxu0 0.0
        %795 = vmatprep.subr.mxu0 0.0
        %796 = vmatpush2.msra.mxu0 0.0
        %797 = vmatprep.subr.mxu0 0.0
        %798 = vmatpush2.msra.mxu0 0.0
        %799 = vmatprep.subr.mxu0 0.0
        %800 = vmatpush2.msra.mxu0 0.0
        %801 = vmatprep.subr.mxu0 0.0
        %802 = vmatpush2.msra.mxu0 0.0
        %803 = vmatprep.subr.mxu0 0.0
        %804 = vmatpush2.msra.mxu0 0.0
        %805 = vmatprep.subr.mxu0 0.0
        %806 = vmatpush2.msra.mxu0 0.0
        %807 = vmatprep.subr.mxu0 0.0
        %808 = vmatpush2.msra.mxu0 0.0
        %809 = vmatprep.subr.mxu0 0.0
        %810 = vmatpush2.msra.mxu0 0.0
        %811 = vmatprep.subr.mxu0 0.0
        %812 = vmatpush2.msra.mxu0 0.0
        %813 = vmatprep.subr.mxu0 0.0
        %814 = vmatpush2.msra.mxu0 0.0
        %815 = vmatprep.subr.mxu0 0.0
        %816 = vmatpush2.msra.mxu0 0.0
        %817 = vmatprep.subr.mxu0 0.0
        %818 = vmatpush2.msra.mxu0 0.0
        %819 = vmatprep.subr.mxu0 0.0
        %820 = vmatpush2.msra.mxu0 0.0
        %821 = vmatprep.subr.mxu0 0.0
        %822 = vmatpush2.msra.mxu0 0.0
        %823 = vmatprep.subr.mxu0 0.0
        %824 = vmatpush2.msra.mxu0 0.0
        %825 = vmatprep.mubr.f32.mxu0 0.0
        %v826 = vand.u32 %v261, 4294901760
        %827 = vmatmul.mubr.f32.gmra.mxu0 %v826
        %v828 = vpop.f32.mrf.mxu0
        %v829 = vadd.f32 %v710, %v828
        %v830 = vpop.f32.mrf.mxu0
        %831 = vdwg.mxu0
        %832 = vmatprep.subr.mxu0 0.0
        %v833 = vand.u32 %v277, 4294901760
        %834 = vmatpush1.msra.mxu0 %v833
        %835 = vmatprep.subr.mxu0 0.0
        %v836 = vand.u32 %v276, 4294901760
        %837 = vmatpush1.msra.mxu0 %v836
        %838 = vmatprep.subr.mxu0 0.0
        %v839 = vand.u32 %v275, 4294901760
        %840 = vmatpush1.msra.mxu0 %v839
        %841 = vmatprep.subr.mxu0 0.0
        %v842 = vand.u32 %v274, 4294901760
        %843 = vmatpush1.msra.mxu0 %v842
        %844 = vmatprep.subr.mxu0 0.0
        %v845 = vand.u32 %v273, 4294901760
        %846 = vmatpush1.msra.mxu0 %v845
        %847 = vmatprep.subr.mxu0 0.0
        %v848 = vand.u32 %v272, 4294901760
        %849 = vmatpush1.msra.mxu0 %v848
        %850 = vmatprep.subr.mxu0 0.0
        %v851 = vand.u32 %v271, 4294901760
        %852 = vmatpush1.msra.mxu0 %v851
        %853 = vmatprep.subr.mxu0 0.0
        %v854 = vand.u32 %v270, 4294901760
        %855 = vmatpush1.msra.mxu0 %v854
        %856 = vmatprep.subr.mxu0 0.0
        %v857 = vand.u32 %v269, 4294901760
        %858 = vmatpush1.msra.mxu0 %v857
        %859 = vmatprep.subr.mxu0 0.0
        %v860 = vand.u32 %v268, 4294901760
        %861 = vmatpush1.msra.mxu0 %v860
        %862 = vmatprep.subr.mxu0 0.0
        %v863 = vand.u32 %v267, 4294901760
        %864 = vmatpush1.msra.mxu0 %v863
        %865 = vmatprep.subr.mxu0 0.0
        %v866 = vand.u32 %v266, 4294901760
        %867 = vmatpush1.msra.mxu0 %v866
        %868 = vmatprep.subr.mxu0 0.0
        %v869 = vand.u32 %v265, 4294901760
        %870 = vmatpush1.msra.mxu0 %v869
        %871 = vmatprep.subr.mxu0 0.0
        %v872 = vand.u32 %v264, 4294901760
        %873 = vmatpush1.msra.mxu0 %v872
        %874 = vmatprep.subr.mxu0 0.0
        %v875 = vand.u32 %v263, 4294901760
        %876 = vmatpush1.msra.mxu0 %v875
        %877 = vmatprep.subr.mxu0 0.0
        %v878 = vand.u32 %v262, 4294901760
        %879 = vmatpush1.msra.mxu0 %v878
        %880 = vmatprep.subr.mxu0 0.0
        %881 = vmatpush2.msra.mxu0 0.0
        %882 = vmatprep.subr.mxu0 0.0
        %883 = vmatpush2.msra.mxu0 0.0
        %884 = vmatprep.subr.mxu0 0.0
        %885 = vmatpush2.msra.mxu0 0.0
        %886 = vmatprep.subr.mxu0 0.0
        %887 = vmatpush2.msra.mxu0 0.0
        %888 = vmatprep.subr.mxu0 0.0
        %889 = vmatpush2.msra.mxu0 0.0
        %890 = vmatprep.subr.mxu0 0.0
        %891 = vmatpush2.msra.mxu0 0.0
        %892 = vmatprep.subr.mxu0 0.0
        %893 = vmatpush2.msra.mxu0 0.0
        %894 = vmatprep.subr.mxu0 0.0
        %895 = vmatpush2.msra.mxu0 0.0
        %896 = vmatprep.subr.mxu0 0.0
        %897 = vmatpush2.msra.mxu0 0.0
        %898 = vmatprep.subr.mxu0 0.0
        %899 = vmatpush2.msra.mxu0 0.0
        %900 = vmatprep.subr.mxu0 0.0
        %901 = vmatpush2.msra.mxu0 0.0
        %902 = vmatprep.subr.mxu0 0.0
        %903 = vmatpush2.msra.mxu0 0.0
        %904 = vmatprep.subr.mxu0 0.0
        %905 = vmatpush2.msra.mxu0 0.0
        %906 = vmatprep.subr.mxu0 0.0
        %907 = vmatpush2.msra.mxu0 0.0
        %908 = vmatprep.subr.mxu0 0.0
        %909 = vmatpush2.msra.mxu0 0.0
        %910 = vmatprep.subr.mxu0 0.0
        %911 = vmatpush2.msra.mxu0 0.0
        %912 = vmatprep.mubr.f32.mxu0 0.0
        %v913 = vand.u32 %v261, 4294901760
        %914 = vmatmul.mubr.f32.gmra.mxu0 %v913
        %v915 = vpop.f32.mrf.mxu0
        %v916 = vadd.f32 %v829, %v915
        %v917 = vpop.f32.mrf.mxu0
        %918 = vdwg.mxu0
        %vm919 = vcmask 261120
        %v920 = vsel %vm919, %v916, 0.0
        %921 = vadd.xlane.f32.xlu0 %v920
        %v922 = vpop.xlane.xlu0 %921
        %v923 = vmul.f32 %v916, %v916
        %v924 = vsel %vm919, %v923, 0.0
        %925 = vadd.xlane.f32.xlu0 %v924
        %v926 = vpop.xlane.xlu0 %925
        %v927 = vmul.f32 %v922, 0.03125
        %v928 = vmul.f32 %v926, 0.03125
        %v929 = vmul.f32 %v927, %v927
        %v930 = vsub.f32 %v928, %v929
        %v931 = vmax.f32 %v930, 0.0
        %v932 = vsub.f32 %v916, %v927
        %v933 = vadd.f32 %v931, 1e-12
        %v934 = vrsqrt.pop %v933
        %v935 = vmul.f32 %v932, %v934
        %v936 = vld [vmem:[%s2] sm:$0x1]
        %v938 = vlaneseq
        %v939 = vshrl.u32 %v938, 7
        %v940 = vsub.s32 0, %v939
        %v941 = vrot.slane %v936, %v940
        %v943 = vmul.f32 %v935, %v941
        %v944 = vld [vmem:[%s3] sm:$0x1]
        %v946 = vlaneseq
        %v947 = vshrl.u32 %v946, 7
        %v948 = vsub.s32 0, %v947
        %v949 = vrot.slane %v944, %v948
        %v951 = vadd.f32 %v943, %v949
        %952 = vst.msk [vmem:[%s238] sm:$0xff] %vm919, %v951
        %s953 = sand.u32 %s115, 1
        %s954 = scalar_lea.sflag [#allocation4], %s953
        %s955 = sand.u32 %s115, 1
        %s956 = smul.addr %s955, 8
        %s957 = scalar_lea.vmem [#allocation3], %s956
        // Predicated region
        $region75: #{tpu_custom_call.1} parent=69 // pred_check
          %p958 = pneg %p125
        $region76: #{tpu_custom_call.1} parent=69 // pred_check_branch
          %960 = sbr.rel (%p958) target = $region78
        $region77: #{tpu_custom_call.1} parent=69 // pred_region
          %s962 = ssub.s32 128, 128
          %963 = vsyncadd %s954, %s962
          %s964 = smul.addr %s18, 128
          %s965 = scalar_lea.hbm %s4, %s964
          %s967 = sshll.u32 %s957, 4
          %s968 = int_to_ptr.vmem [resolvable:$true] %s967
          %970 = dma.vmem_to_hbm [thread:$0]  %s968, 128, %s965, %s954
        $region78: #{tpu_custom_call.1} parent=69 // pred_fallthru
          _
      $region70: #{tpu_custom_call.1} parent=5 // pred_fallthru
        _
      %p971 = scmp.le.s32.totalorder 2, %s13
      // Predicated region
      $region79: #{tpu_custom_call.1} parent=5 // pred_check
        %p972 = pneg %p971
      $region80: #{tpu_custom_call.1} parent=5 // pred_check_branch
        %974 = sbr.rel (%p972) target = $region82
      $region81: #{tpu_custom_call.1} parent=5 // pred_region
        %s975 = ssub.s32 %s13, 2
        // Predicated region
        $region83: #{tpu_custom_call.1} parent=81 // pred_check
          %p976 = pneg %p131
        $region84: #{tpu_custom_call.1} parent=81 // pred_check_branch
          %978 = sbr.rel (%p976) target = $region86
        $region85: #{tpu_custom_call.1} parent=81 // pred_region
          %s979 = sand.u32 %s116, 1
          %s980 = scalar_lea.sflag [#allocation4], %s979
          %s981 = sand.u32 %s116, 1
          %s982 = smul.addr %s981, 8
          %s983 = scalar_lea.vmem [#allocation3], %s982
          %984 = dma.done %s980, 128
        $region86: #{tpu_custom_call.1} parent=81 // pred_fallthru
          _
      $region82: #{tpu_custom_call.1} parent=5 // pred_fallthru
        _
    $region6: #{tpu_custom_call.1} parent=1 // loop_footer
      %s17 = sadd.s32 1, %s13
    $region7: #{tpu_custom_call.1} parent=1 // loop_footer_branch
      %12 = sbr.rel target = $region3
    $region8: #{tpu_custom_call.1} parent=1 // loop_exit
      _
    %985 = vsyncpa [#allocation4], 1
    %s986 = scalar_lea.sflag [#allocation4], 1
    %987 = vsyncpa %s986, 1

</llo_original>
